<compile_context>
chip_gen: v7x
topology: tpu7x:2x2x1
jax: 0.10.0
libtpu: 0.0.40
codegen_flags: <defaults>
</compile_context>

<pallas_src>
import jax
import jax.numpy as jnp
from jax.experimental import pallas as pl
from jax.experimental.pallas import tpu as pltpu

_ALIGN = 8  # f32 sublane alignment (8 rows per vreg)


def _round_up(n, m):
    return ((n + m - 1) // m) * m


def _num_tensorcores():
    """Best-effort TensorCore count (v7x = 2, v5e/v6e = 1). Falls back to 1."""
    try:
        info = pltpu.get_tpu_info()
        for attr in ("num_cores", "core_count", "num_tensorcores",
                     "tensorcore_count"):
            n = getattr(info, attr, None)
            if isinstance(n, int) and n > 0:
                return n
    except Exception:
        pass
    return 1


def _encoder_kernel(x_ref,
                    w1_ref, b1_ref,
                    w2_ref, b2_ref,
                    w3_ref, b3_ref,
                    w4_ref, b4_ref,
                    o_ref):
    """Fused 4-layer MLP on one batch tile: (Linear+ReLU) x3 -> Linear.

    All operands are f32; MXU accumulation forced to f32.  The bias add and
    ReLU epilogue run on the VPU in f32 (safe on v5e which has no bf16 VPU).
    """

    def lin(h, w_ref, b_ref):
        acc = jnp.dot(h, w_ref[...], preferred_element_type=jnp.float32)
        return acc + b_ref[...]

    h = jnp.maximum(lin(x_ref[...], w1_ref, b1_ref), 0.0)
    h = jnp.maximum(lin(h, w2_ref, b2_ref), 0.0)
    h = jnp.maximum(lin(h, w3_ref, b3_ref), 0.0)
    o_ref[...] = lin(h, w4_ref, b4_ref).astype(o_ref.dtype)


def encoder_forward(x, params, *, tm=4096, num_cores=None):
    """x: (B, x_dim) float32. params: dict of (in,out) weights and (1,out) biases."""
    B, x_dim = x.shape
    z_dim = params["w4"].shape[1]
    if num_cores is None:
        num_cores = _num_tensorcores()

    # --- tile sizing ---------------------------------------------------------
    # As large as the batch allows (capped at tm); only split into >1 grid step
    # for small batches when there are multiple TensorCores to feed (v7x), and
    # round the grid up to a multiple of the core count for even sharding.
    tm_eff = min(_round_up(tm, _ALIGN), _round_up(B, _ALIGN))
    grid = pl.cdiv(B, tm_eff)
    if num_cores > 1:
        grid_rounded = _round_up(grid, num_cores)
        tm_eff = min(tm_eff, _round_up(pl.cdiv(B, grid_rounded), _ALIGN))
        grid = pl.cdiv(B, tm_eff)
    # VMEM note: tm=4096 -> x tile 0.5 MiB + out tile 0.25 MiB, double-buffered
    # ~1.8 MiB total (plus ~56 KiB of weights) -- fits every generation's
    # scoped default with large headroom, so no vmem_limit_bytes override.

    # Weights/biases are tiny -> whole-array blocks, constant index map
    # (block index never changes across the grid, so they are not re-fetched
    # per step and stay resident in VMEM).
    def whole(arr):
        return pl.BlockSpec(arr.shape, lambda i: (0, 0))

    in_specs = [
        pl.BlockSpec((tm_eff, x_dim), lambda i: (i, 0)),        # x tile
        whole(params["w1"]), whole(params["b1"]),
        whole(params["w2"]), whole(params["b2"]),
        whole(params["w3"]), whole(params["b3"]),
        whole(params["w4"]), whole(params["b4"]),
    ]
    # z_dim << 128 -> masked stores; accepted (output bytes are negligible and
    # lane-dense repacking only pays off if vst is the binding slot on v5e).
    out_spec = pl.BlockSpec((tm_eff, z_dim), lambda i: (i, 0))

    layer_dims = [(params[f"w{k}"].shape[0], params[f"w{k}"].shape[1])
                  for k in range(1, 5)]
    flops = 2 * B * sum(fi * fo for fi, fo in layer_dims)
    w_bytes = sum((fi * fo + fo) * 4 for fi, fo in layer_dims)
    bytes_accessed = B * (x_dim + z_dim) * 4 + w_bytes

    return pl.pallas_call(
        _encoder_kernel,
        out_shape=jax.ShapeDtypeStruct((B, z_dim), jnp.float32),
        grid_spec=pltpu.PrefetchScalarGridSpec(
            num_scalar_prefetch=0,
            grid=(grid,),
            in_specs=in_specs,
            out_specs=out_spec,
        ),
        compiler_params=pltpu.CompilerParams(
            dimension_semantics=("parallel",)),
        cost_estimate=pl.CostEstimate(
            flops=int(flops), transcendentals=0,
            bytes_accessed=int(bytes_accessed)),
    )(x,
      params["w1"], params["b1"],
      params["w2"], params["b2"],
      params["w3"], params["b3"],
      params["w4"], params["b4"])


def init_encoder_params(key, x_dim, z_dim):
    """Deterministic init mimicking torch.nn.Linear default (uniform +/- 1/sqrt(fan_in)).
    Weights stored transposed relative to PyTorch: (in_features, out_features)."""
    dims = [(x_dim, 40), (40, 30), (30, 20), (20, z_dim)]
    params = {}
    for idx, (fan_in, fan_out) in enumerate(dims, start=1):
        key, kw, kb = jax.random.split(key, 3)
        bound = 1.0 / jnp.sqrt(jnp.float32(fan_in))
        params[f"w{idx}"] = jax.random.uniform(
            kw, (fan_in, fan_out), jnp.float32, minval=-bound, maxval=bound)
        params[f"b{idx}"] = jax.random.uniform(
            kb, (1, fan_out), jnp.float32, minval=-bound, maxval=bound)
    return params


def encoder_reference_f32(x, params):
    """Pure f32 forward (PyTorch module semantics), highest matmul precision."""
    def lin(h, w, b):
        return jnp.dot(h, w, precision=jax.lax.Precision.HIGHEST) + b
    h = jnp.maximum(lin(x, params["w1"], params["b1"]), 0.0)
    h = jnp.maximum(lin(h, params["w2"], params["b2"]), 0.0)
    h = jnp.maximum(lin(h, params["w3"], params["b3"]), 0.0)
    return lin(h, params["w4"], params["b4"])


if __name__ == "__main__":
    x_dim, z_dim, batch = 32, 16, 64

    key = jax.random.PRNGKey(0)
    key, kx = jax.random.split(key)
    x = jax.random.normal(kx, (batch, x_dim), dtype=jnp.float32)
    params = init_encoder_params(key, x_dim, z_dim)

    out = jax.block_until_ready(encoder_forward(x, params))
    assert out.shape == (batch, z_dim)

    # Check vs the f32 module reference (tolerance covers MXU f32-pass rounding).
    ref = encoder_reference_f32(x, params)
    assert jnp.allclose(out, ref, atol=2e-2, rtol=2e-2), \
        "mismatch vs f32 module reference"

    # Multi-step grid (small forced tile) must agree with the single-tile run.
    out_tiled = jax.block_until_ready(encoder_forward(x, params, tm=16))
    assert jnp.allclose(out_tiled, out, atol=1e-6, rtol=1e-6), \
        "multi-step grid path mismatch"

    # Non-divisible batch exercises the cdiv grid + masked last-block path.
    x_odd = x[:50]
    out_odd = jax.block_until_ready(encoder_forward(x_odd, params))
    assert out_odd.shape == (50, z_dim)
    assert jnp.allclose(out_odd, out[:50], atol=1e-6, rtol=1e-6), \
        "ragged-batch path mismatch"

    # Exercise the multi-core (v7x-style) grid splitting explicitly.
    out_mc = jax.block_until_ready(encoder_forward(x, params, num_cores=2))
    assert jnp.allclose(out_mc, out, atol=1e-6, rtol=1e-6), \
        "core-split path mismatch"

    print("KERNEL_OK")
</pallas_src>

<mosaic_0001>
module attributes {stable_mosaic.version = 11 : i64} {
  func.func @_encoder_kernel(%arg0: i32, %arg1: memref<64x32xf32, #tpu.memory_space<vmem>>, %arg2: memref<32x40xf32, #tpu.memory_space<vmem>>, %arg3: memref<1x40xf32, #tpu.memory_space<vmem>>, %arg4: memref<40x30xf32, #tpu.memory_space<vmem>>, %arg5: memref<1x30xf32, #tpu.memory_space<vmem>>, %arg6: memref<30x20xf32, #tpu.memory_space<vmem>>, %arg7: memref<1x20xf32, #tpu.memory_space<vmem>>, %arg8: memref<20x16xf32, #tpu.memory_space<vmem>>, %arg9: memref<1x16xf32, #tpu.memory_space<vmem>>, %arg10: memref<64x16xf32, #tpu.memory_space<vmem>>) attributes {dimension_semantics = [#tpu.dimension_semantics<parallel>], iteration_bounds = array<i64: 1>, scalar_prefetch = 0 : i64, scratch_operands = 0 : i64, tpu.core_type = #tpu.core_type<tc>, window_params = [{transform_indices = @transform_0, window_bounds = array<i64: 64, 32>}, {pipeline_mode = #tpu.pipeline_mode<synchronous>, transform_indices = @transform_1, window_bounds = array<i64: 32, 40>}, {pipeline_mode = #tpu.pipeline_mode<synchronous>, transform_indices = @transform_2, window_bounds = array<i64: 1, 40>}, {pipeline_mode = #tpu.pipeline_mode<synchronous>, transform_indices = @transform_3, window_bounds = array<i64: 40, 30>}, {pipeline_mode = #tpu.pipeline_mode<synchronous>, transform_indices = @transform_4, window_bounds = array<i64: 1, 30>}, {pipeline_mode = #tpu.pipeline_mode<synchronous>, transform_indices = @transform_5, window_bounds = array<i64: 30, 20>}, {pipeline_mode = #tpu.pipeline_mode<synchronous>, transform_indices = @transform_6, window_bounds = array<i64: 1, 20>}, {pipeline_mode = #tpu.pipeline_mode<synchronous>, transform_indices = @transform_7, window_bounds = array<i64: 20, 16>}, {pipeline_mode = #tpu.pipeline_mode<synchronous>, transform_indices = @transform_8, window_bounds = array<i64: 1, 16>}, {transform_indices = @transform_9, window_bounds = array<i64: 64, 16>}]} {
    %c0 = arith.constant 0 : index
    %c0_0 = arith.constant 0 : index
    %0 = vector.load %arg1[%c0, %c0_0] : memref<64x32xf32, #tpu.memory_space<vmem>>, vector<64x32xf32>
    %c0_1 = arith.constant 0 : index
    %c0_2 = arith.constant 0 : index
    %1 = vector.load %arg2[%c0_1, %c0_2] : memref<32x40xf32, #tpu.memory_space<vmem>>, vector<32x40xf32>
    %cst = arith.constant dense<0.000000e+00> : vector<64x40xf32>
    %2 = tpu.matmul %0, %1, %cst {dimension_numbers = #tpu.dot_dimension_numbers<[1], [0], [0], [1], [0, 0, 1, 1], [], []>} : vector<64x32xf32>, vector<32x40xf32>, vector<64x40xf32> -> vector<64x40xf32>
    %c0_3 = arith.constant 0 : index
    %c0_4 = arith.constant 0 : index
    %3 = vector.load %arg3[%c0_3, %c0_4] : memref<1x40xf32, #tpu.memory_space<vmem>>, vector<1x40xf32>
    %4 = vector.broadcast %3 : vector<1x40xf32> to vector<64x40xf32>
    %5 = arith.addf %2, %4 : vector<64x40xf32>
    %cst_5 = arith.constant 0.000000e+00 : f32
    %6 = vector.broadcast %cst_5 : f32 to vector<64x40xf32>
    %7 = arith.maximumf %5, %6 : vector<64x40xf32>
    %c0_6 = arith.constant 0 : index
    %c0_7 = arith.constant 0 : index
    %8 = vector.load %arg4[%c0_6, %c0_7] : memref<40x30xf32, #tpu.memory_space<vmem>>, vector<40x30xf32>
    %cst_8 = arith.constant dense<0.000000e+00> : vector<64x30xf32>
    %9 = tpu.matmul %7, %8, %cst_8 {dimension_numbers = #tpu.dot_dimension_numbers<[1], [0], [0], [1], [0, 0, 1, 1], [], []>} : vector<64x40xf32>, vector<40x30xf32>, vector<64x30xf32> -> vector<64x30xf32>
    %c0_9 = arith.constant 0 : index
    %c0_10 = arith.constant 0 : index
    %10 = vector.load %arg5[%c0_9, %c0_10] : memref<1x30xf32, #tpu.memory_space<vmem>>, vector<1x30xf32>
    %11 = vector.broadcast %10 : vector<1x30xf32> to vector<64x30xf32>
    %12 = arith.addf %9, %11 : vector<64x30xf32>
    %cst_11 = arith.constant 0.000000e+00 : f32
    %13 = vector.broadcast %cst_11 : f32 to vector<64x30xf32>
    %14 = arith.maximumf %12, %13 : vector<64x30xf32>
    %c0_12 = arith.constant 0 : index
    %c0_13 = arith.constant 0 : index
    %15 = vector.load %arg6[%c0_12, %c0_13] : memref<30x20xf32, #tpu.memory_space<vmem>>, vector<30x20xf32>
    %cst_14 = arith.constant dense<0.000000e+00> : vector<64x20xf32>
    %16 = tpu.matmul %14, %15, %cst_14 {dimension_numbers = #tpu.dot_dimension_numbers<[1], [0], [0], [1], [0, 0, 1, 1], [], []>} : vector<64x30xf32>, vector<30x20xf32>, vector<64x20xf32> -> vector<64x20xf32>
    %c0_15 = arith.constant 0 : index
    %c0_16 = arith.constant 0 : index
    %17 = vector.load %arg7[%c0_15, %c0_16] : memref<1x20xf32, #tpu.memory_space<vmem>>, vector<1x20xf32>
    %18 = vector.broadcast %17 : vector<1x20xf32> to vector<64x20xf32>
    %19 = arith.addf %16, %18 : vector<64x20xf32>
    %cst_17 = arith.constant 0.000000e+00 : f32
    %20 = vector.broadcast %cst_17 : f32 to vector<64x20xf32>
    %21 = arith.maximumf %19, %20 : vector<64x20xf32>
    %c0_18 = arith.constant 0 : index
    %c0_19 = arith.constant 0 : index
    %22 = vector.load %arg8[%c0_18, %c0_19] : memref<20x16xf32, #tpu.memory_space<vmem>>, vector<20x16xf32>
    %cst_20 = arith.constant dense<0.000000e+00> : vector<64x16xf32>
    %23 = tpu.matmul %21, %22, %cst_20 {dimension_numbers = #tpu.dot_dimension_numbers<[1], [0], [0], [1], [0, 0, 1, 1], [], []>} : vector<64x20xf32>, vector<20x16xf32>, vector<64x16xf32> -> vector<64x16xf32>
    %c0_21 = arith.constant 0 : index
    %c0_22 = arith.constant 0 : index
    %24 = vector.load %arg9[%c0_21, %c0_22] : memref<1x16xf32, #tpu.memory_space<vmem>>, vector<1x16xf32>
    %25 = vector.broadcast %24 : vector<1x16xf32> to vector<64x16xf32>
    %26 = arith.addf %23, %25 : vector<64x16xf32>
    %c0_23 = arith.constant 0 : index
    %c0_24 = arith.constant 0 : index
    %27 = vector.load %arg10[%c0_23, %c0_24] : memref<64x16xf32, #tpu.memory_space<vmem>>, vector<64x16xf32>
    tpu.vector_store %arg10[%c0_23, %c0_24], %26 {strides = array<i32>} : memref<64x16xf32, #tpu.memory_space<vmem>>, vector<64x16xf32>,
    return
  }
  func.func @transform_0(%arg0: i32) -> (i32, i32) {
    %c0_i32 = arith.constant 0 : i32
    %c0_i32_0 = arith.constant 0 : i32
    return %arg0, %c0_i32 : i32, i32
  }
  func.func @transform_1(%arg0: i32) -> (i32, i32) {
    %c0_i32 = arith.constant 0 : i32
    %c0_i32_0 = arith.constant 0 : i32
    %c0_i32_1 = arith.constant 0 : i32
    return %c0_i32, %c0_i32_0 : i32, i32
  }
  func.func @transform_2(%arg0: i32) -> (i32, i32) {
    %c0_i32 = arith.constant 0 : i32
    %c0_i32_0 = arith.constant 0 : i32
    %c0_i32_1 = arith.constant 0 : i32
    return %c0_i32, %c0_i32_0 : i32, i32
  }
  func.func @transform_3(%arg0: i32) -> (i32, i32) {
    %c0_i32 = arith.constant 0 : i32
    %c0_i32_0 = arith.constant 0 : i32
    %c0_i32_1 = arith.constant 0 : i32
    return %c0_i32, %c0_i32_0 : i32, i32
  }
  func.func @transform_4(%arg0: i32) -> (i32, i32) {
    %c0_i32 = arith.constant 0 : i32
    %c0_i32_0 = arith.constant 0 : i32
    %c0_i32_1 = arith.constant 0 : i32
    return %c0_i32, %c0_i32_0 : i32, i32
  }
  func.func @transform_5(%arg0: i32) -> (i32, i32) {
    %c0_i32 = arith.constant 0 : i32
    %c0_i32_0 = arith.constant 0 : i32
    %c0_i32_1 = arith.constant 0 : i32
    return %c0_i32, %c0_i32_0 : i32, i32
  }
  func.func @transform_6(%arg0: i32) -> (i32, i32) {
    %c0_i32 = arith.constant 0 : i32
    %c0_i32_0 = arith.constant 0 : i32
    %c0_i32_1 = arith.constant 0 : i32
    return %c0_i32, %c0_i32_0 : i32, i32
  }
  func.func @transform_7(%arg0: i32) -> (i32, i32) {
    %c0_i32 = arith.constant 0 : i32
    %c0_i32_0 = arith.constant 0 : i32
    %c0_i32_1 = arith.constant 0 : i32
    return %c0_i32, %c0_i32_0 : i32, i32
  }
  func.func @transform_8(%arg0: i32) -> (i32, i32) {
    %c0_i32 = arith.constant 0 : i32
    %c0_i32_0 = arith.constant 0 : i32
    %c0_i32_1 = arith.constant 0 : i32
    return %c0_i32, %c0_i32_0 : i32, i32
  }
  func.func @transform_9(%arg0: i32) -> (i32, i32) {
    %c0_i32 = arith.constant 0 : i32
    %c0_i32_0 = arith.constant 0 : i32
    return %arg0, %c0_i32 : i32, i32
  }
}

</mosaic_0001>

<llo_original>
// kernel: tpu_custom_call.1
$region0: #{tpu_custom_call.1}
  #allocation0 [shape = 'u32[]', space=smem, size = 0x4, offset = 0x4, fixed_abs, tag = 'smem constant byte address 0x4 - core index']
  #allocation1 [shape = 'u32[144,128]{1,0:T(1,128)}', space=vmem, size = 0x12000, scoped, tag = 'internal scratch']
  %s0 = inlined_call_operand.vmem [shape: f32[64,32], index: 0, kind: input, shape index: {}]
  %s1 = inlined_call_operand.vmem [shape: f32[32,40], index: 1, kind: input, shape index: {}]
  %s2 = inlined_call_operand.vmem [shape: f32[1,40], index: 2, kind: input, shape index: {}]
  %s3 = inlined_call_operand.vmem [shape: f32[40,30], index: 3, kind: input, shape index: {}]
  %s4 = inlined_call_operand.vmem [shape: f32[1,30], index: 4, kind: input, shape index: {}]
  %s5 = inlined_call_operand.vmem [shape: f32[30,20], index: 5, kind: input, shape index: {}]
  %s6 = inlined_call_operand.vmem [shape: f32[1,20], index: 6, kind: input, shape index: {}]
  %s7 = inlined_call_operand.vmem [shape: f32[20,16], index: 7, kind: input, shape index: {}]
  %s8 = inlined_call_operand.vmem [shape: f32[1,16], index: 8, kind: input, shape index: {}]
  %s9 = inlined_call_operand.vmem [shape: f32[64,16], index: 9, kind: output, shape index: {}]
  %s10 = sld [smem:[#allocation0]]
  $region46: #{tpu_custom_call.1} parent=0
    _
  %s12 = ssub.s32 1, %s10
  %s13 = scalar_select 0, %s12, %s10
  // Predicated region
  $region2: #{tpu_custom_call.1} parent=0 // pred_check
    _
  $region3: #{tpu_custom_call.1} parent=0 // pred_check_branch
    %15 = sbr.rel (0) target = $region5
  $region4: #{tpu_custom_call.1} parent=0 // pred_region
    _
  $region5: #{tpu_custom_call.1} parent=0 // pred_fallthru
    _
  // Predicated region
  $region6: #{tpu_custom_call.1} parent=0 // pred_check
    _
  $region7: #{tpu_custom_call.1} parent=0 // pred_check_branch
    %17 = sbr.rel (0) target = $region9
  $region8: #{tpu_custom_call.1} parent=0 // pred_region
    _
  $region9: #{tpu_custom_call.1} parent=0 // pred_fallthru
    _
  // Predicated region
  $region10: #{tpu_custom_call.1} parent=0 // pred_check
    _
  $region11: #{tpu_custom_call.1} parent=0 // pred_check_branch
    %19 = sbr.rel (0) target = $region13
  $region12: #{tpu_custom_call.1} parent=0 // pred_region
    _
  $region13: #{tpu_custom_call.1} parent=0 // pred_fallthru
    _
  // Predicated region
  $region14: #{tpu_custom_call.1} parent=0 // pred_check
    _
  $region15: #{tpu_custom_call.1} parent=0 // pred_check_branch
    %21 = sbr.rel (0) target = $region17
  $region16: #{tpu_custom_call.1} parent=0 // pred_region
    _
  $region17: #{tpu_custom_call.1} parent=0 // pred_fallthru
    _
  // Predicated region
  $region18: #{tpu_custom_call.1} parent=0 // pred_check
    _
  $region19: #{tpu_custom_call.1} parent=0 // pred_check_branch
    %23 = sbr.rel (0) target = $region21
  $region20: #{tpu_custom_call.1} parent=0 // pred_region
    _
  $region21: #{tpu_custom_call.1} parent=0 // pred_fallthru
    _
  // Predicated region
  $region22: #{tpu_custom_call.1} parent=0 // pred_check
    _
  $region23: #{tpu_custom_call.1} parent=0 // pred_check_branch
    %25 = sbr.rel (0) target = $region25
  $region24: #{tpu_custom_call.1} parent=0 // pred_region
    _
  $region25: #{tpu_custom_call.1} parent=0 // pred_fallthru
    _
  // Predicated region
  $region26: #{tpu_custom_call.1} parent=0 // pred_check
    _
  $region27: #{tpu_custom_call.1} parent=0 // pred_check_branch
    %27 = sbr.rel (0) target = $region29
  $region28: #{tpu_custom_call.1} parent=0 // pred_region
    _
  $region29: #{tpu_custom_call.1} parent=0 // pred_fallthru
    _
  // Predicated region
  $region30: #{tpu_custom_call.1} parent=0 // pred_check
    _
  $region31: #{tpu_custom_call.1} parent=0 // pred_check_branch
    %29 = sbr.rel (0) target = $region33
  $region32: #{tpu_custom_call.1} parent=0 // pred_region
    _
  $region33: #{tpu_custom_call.1} parent=0 // pred_fallthru
    _
  // Predicated region
  $region34: #{tpu_custom_call.1} parent=0 // pred_check
    _
  $region35: #{tpu_custom_call.1} parent=0 // pred_check_branch
    %31 = sbr.rel (0) target = $region37
  $region36: #{tpu_custom_call.1} parent=0 // pred_region
    _
  $region37: #{tpu_custom_call.1} parent=0 // pred_fallthru
    _
  %v32 = vld [vmem:[%s0] sm:$0xff]
  %v33 = vld [vmem:[%s0 + $0x8] sm:$0xff]
  %v34 = vld [vmem:[%s0 + $0x10] sm:$0xff]
  %v35 = vld [vmem:[%s0 + $0x18] sm:$0xff]
  %v36 = vld [vmem:[%s0 + $0x20] sm:$0xff]
  %v37 = vld [vmem:[%s0 + $0x28] sm:$0xff]
  %v38 = vld [vmem:[%s0 + $0x30] sm:$0xff]
  %v39 = vld [vmem:[%s0 + $0x38] sm:$0xff]
  %v40 = vld [vmem:[%s1] sm:$0xff]
  %v41 = vld [vmem:[%s1 + $0x8] sm:$0xff]
  %v42 = vld [vmem:[%s1 + $0x10] sm:$0xff]
  %v43 = vld [vmem:[%s1 + $0x18] sm:$0xff]
  %v44 = vld [vmem:[%s2] sm:$0x1]
  %v46 = vlaneseq
  %v47 = vshrl.u32 %v46, 7
  %v48 = vsub.s32 0, %v47
  %v49 = vrot.slane %v44, %v48
  %vm51 = vcmask 261120
  %v53 = vsel %vm51, %v32, 0
  %v56 = vsel %vm51, %v33, 0
  %v59 = vsel %vm51, %v34, 0
  %v62 = vsel %vm51, %v35, 0
  %v65 = vsel %vm51, %v36, 0
  %v68 = vsel %vm51, %v37, 0
  %v71 = vsel %vm51, %v38, 0
  %v74 = vsel %vm51, %v39, 0
  %76 = vmatprep.subr.mxu0 0.0
  %77 = vmatpush1.msra.mxu0 %v40
  %78 = vmatprep.subr.mxu0 0.0
  %79 = vmatpush1.msra.mxu0 %v41
  %80 = vmatprep.subr.mxu0 0.0
  %81 = vmatpush1.msra.mxu0 %v42
  %82 = vmatprep.subr.mxu0 0.0
  %83 = vmatpush1.msra.mxu0 %v43
  %84 = vmatprep.subr.mxu0 0.0
  %85 = vmatpush1.msra.mxu0 0.0
  %86 = vmatprep.subr.mxu0 0.0
  %87 = vmatpush1.msra.mxu0 0.0
  %88 = vmatprep.subr.mxu0 0.0
  %89 = vmatpush1.msra.mxu0 0.0
  %90 = vmatprep.subr.mxu0 0.0
  %91 = vmatpush1.msra.mxu0 0.0
  %92 = vmatprep.subr.mxu0 0.0
  %93 = vmatpush1.msra.mxu0 0.0
  %94 = vmatprep.subr.mxu0 0.0
  %95 = vmatpush1.msra.mxu0 0.0
  %96 = vmatprep.subr.mxu0 0.0
  %97 = vmatpush1.msra.mxu0 0.0
  %98 = vmatprep.subr.mxu0 0.0
  %99 = vmatpush1.msra.mxu0 0.0
  %100 = vmatprep.subr.mxu0 0.0
  %101 = vmatpush1.msra.mxu0 0.0
  %102 = vmatprep.subr.mxu0 0.0
  %103 = vmatpush1.msra.mxu0 0.0
  %104 = vmatprep.subr.mxu0 0.0
  %105 = vmatpush1.msra.mxu0 0.0
  %106 = vmatprep.subr.mxu0 0.0
  %107 = vmatpush1.msra.mxu0 0.0
  %108 = vmatprep.subr.mxu0 0.0
  %109 = vmatpush1.msra.mxu0 0.0
  %110 = vmatprep.subr.mxu0 0.0
  %111 = vmatpush1.msra.mxu0 0.0
  %112 = vmatprep.subr.mxu0 0.0
  %113 = vmatpush1.msra.mxu0 0.0
  %114 = vmatprep.subr.mxu0 0.0
  %115 = vmatpush1.msra.mxu0 0.0
  %116 = vmatprep.subr.mxu0 0.0
  %117 = vmatpush1.msra.mxu0 0.0
  %118 = vmatprep.subr.mxu0 0.0
  %119 = vmatpush1.msra.mxu0 0.0
  %120 = vmatprep.subr.mxu0 0.0
  %121 = vmatpush1.msra.mxu0 0.0
  %122 = vmatprep.subr.mxu0 0.0
  %123 = vmatpush1.msra.mxu0 0.0
  %124 = vmatprep.subr.mxu0 0.0
  %125 = vmatpush1.msra.mxu0 0.0
  %126 = vmatprep.subr.mxu0 0.0
  %127 = vmatpush1.msra.mxu0 0.0
  %128 = vmatprep.subr.mxu0 0.0
  %129 = vmatpush1.msra.mxu0 0.0
  %130 = vmatprep.subr.mxu0 0.0
  %131 = vmatpush1.msra.mxu0 0.0
  %132 = vmatprep.subr.mxu0 0.0
  %133 = vmatpush1.msra.mxu0 0.0
  %134 = vmatprep.subr.mxu0 0.0
  %135 = vmatpush1.msra.mxu0 0.0
  %136 = vmatprep.subr.mxu0 0.0
  %137 = vmatpush1.msra.mxu0 0.0
  %138 = vmatprep.subr.mxu0 0.0
  %139 = vmatpush1.msra.mxu0 0.0
  %140 = vmatprep.mubr.f32.mxu0 0.0
  %141 = vmatmul.mubr.f32.gmra.mrb[0].mxu0 %v53
  %v142 = vpop.f32.mrb[0].mxu0
  %v143 = vadd.f32 %v49, %v142
  %v144 = vpop.f32.mrb[0].mxu0
  %145 = vmatprep.mubr.f32.mxu0 0.0
  %146 = vmatmul.mubr.f32.gmra.mrb[0].mxu0 %v56
  %v147 = vpop.f32.mrb[0].mxu0
  %v148 = vadd.f32 %v49, %v147
  %v149 = vpop.f32.mrb[0].mxu0
  %150 = vmatprep.mubr.f32.mxu0 0.0
  %151 = vmatmul.mubr.f32.gmra.mrb[0].mxu0 %v59
  %v152 = vpop.f32.mrb[0].mxu0
  %v153 = vadd.f32 %v49, %v152
  %v154 = vpop.f32.mrb[0].mxu0
  %155 = vmatprep.mubr.f32.mxu0 0.0
  %156 = vmatmul.mubr.f32.gmra.mrb[0].mxu0 %v62
  %v157 = vpop.f32.mrb[0].mxu0
  %v158 = vadd.f32 %v49, %v157
  %v159 = vpop.f32.mrb[0].mxu0
  %160 = vmatprep.mubr.f32.mxu0 0.0
  %161 = vmatmul.mubr.f32.gmra.mrb[0].mxu0 %v65
  %v162 = vpop.f32.mrb[0].mxu0
  %v163 = vadd.f32 %v49, %v162
  %v164 = vpop.f32.mrb[0].mxu0
  %165 = vmatprep.mubr.f32.mxu0 0.0
  %166 = vmatmul.mubr.f32.gmra.mrb[0].mxu0 %v68
  %v167 = vpop.f32.mrb[0].mxu0
  %v168 = vadd.f32 %v49, %v167
  %v169 = vpop.f32.mrb[0].mxu0
  %170 = vmatprep.mubr.f32.mxu0 0.0
  %171 = vmatmul.mubr.f32.gmra.mrb[0].mxu0 %v71
  %v172 = vpop.f32.mrb[0].mxu0
  %v173 = vadd.f32 %v49, %v172
  %v174 = vpop.f32.mrb[0].mxu0
  %175 = vmatprep.mubr.f32.mxu0 0.0
  %176 = vmatmul.mubr.f32.gmra.mrb[0].mxu0 %v74
  %v177 = vpop.f32.mrb[0].mxu0
  %v178 = vadd.f32 %v49, %v177
  %v179 = vpop.f32.mrb[0].mxu0
  %180 = vdwg.mxu0
  %v181 = vmax.f32 %v143, 0.0
  %v182 = vmax.f32 %v148, 0.0
  %v183 = vmax.f32 %v153, 0.0
  %v184 = vmax.f32 %v158, 0.0
  %v185 = vmax.f32 %v163, 0.0
  %v186 = vmax.f32 %v168, 0.0
  %v187 = vmax.f32 %v173, 0.0
  %v188 = vmax.f32 %v178, 0.0
  %v189 = vld [vmem:[%s3] sm:$0xff]
  %v190 = vld [vmem:[%s3 + $0x8] sm:$0xff]
  %v191 = vld [vmem:[%s3 + $0x10] sm:$0xff]
  %v192 = vld [vmem:[%s3 + $0x18] sm:$0xff]
  %v193 = vld [vmem:[%s3 + $0x20] sm:$0xff]
  %v194 = vld [vmem:[%s4] sm:$0x1]
  %v196 = vlaneseq
  %v197 = vshrl.u32 %v196, 7
  %v198 = vsub.s32 0, %v197
  %v199 = vrot.slane %v194, %v198
  %vm201 = vcmask 326656
  %v203 = vsel %vm201, %v181, 0
  %v206 = vsel %vm201, %v182, 0
  %v209 = vsel %vm201, %v183, 0
  %v212 = vsel %vm201, %v184, 0
  %v215 = vsel %vm201, %v185, 0
  %v218 = vsel %vm201, %v186, 0
  %v221 = vsel %vm201, %v187, 0
  %v224 = vsel %vm201, %v188, 0
  %226 = vmatprep.subr.mxu0 0.0
  %227 = vmatpush1.msra.mxu0 %v189
  %228 = vmatprep.subr.mxu0 0.0
  %229 = vmatpush1.msra.mxu0 %v190
  %230 = vmatprep.subr.mxu0 0.0
  %231 = vmatpush1.msra.mxu0 %v191
  %232 = vmatprep.subr.mxu0 0.0
  %233 = vmatpush1.msra.mxu0 %v192
  %234 = vmatprep.subr.mxu0 0.0
  %235 = vmatpush1.msra.mxu0 %v193
  %236 = vmatprep.subr.mxu0 0.0
  %237 = vmatpush1.msra.mxu0 0.0
  %238 = vmatprep.subr.mxu0 0.0
  %239 = vmatpush1.msra.mxu0 0.0
  %240 = vmatprep.subr.mxu0 0.0
  %241 = vmatpush1.msra.mxu0 0.0
  %242 = vmatprep.subr.mxu0 0.0
  %243 = vmatpush1.msra.mxu0 0.0
  %244 = vmatprep.subr.mxu0 0.0
  %245 = vmatpush1.msra.mxu0 0.0
  %246 = vmatprep.subr.mxu0 0.0
  %247 = vmatpush1.msra.mxu0 0.0
  %248 = vmatprep.subr.mxu0 0.0
  %249 = vmatpush1.msra.mxu0 0.0
  %250 = vmatprep.subr.mxu0 0.0
  %251 = vmatpush1.msra.mxu0 0.0
  %252 = vmatprep.subr.mxu0 0.0
  %253 = vmatpush1.msra.mxu0 0.0
  %254 = vmatprep.subr.mxu0 0.0
  %255 = vmatpush1.msra.mxu0 0.0
  %256 = vmatprep.subr.mxu0 0.0
  %257 = vmatpush1.msra.mxu0 0.0
  %258 = vmatprep.subr.mxu0 0.0
  %259 = vmatpush1.msra.mxu0 0.0
  %260 = vmatprep.subr.mxu0 0.0
  %261 = vmatpush1.msra.mxu0 0.0
  %262 = vmatprep.subr.mxu0 0.0
  %263 = vmatpush1.msra.mxu0 0.0
  %264 = vmatprep.subr.mxu0 0.0
  %265 = vmatpush1.msra.mxu0 0.0
  %266 = vmatprep.subr.mxu0 0.0
  %267 = vmatpush1.msra.mxu0 0.0
  %268 = vmatprep.subr.mxu0 0.0
  %269 = vmatpush1.msra.mxu0 0.0
  %270 = vmatprep.subr.mxu0 0.0
  %271 = vmatpush1.msra.mxu0 0.0
  %272 = vmatprep.subr.mxu0 0.0
  %273 = vmatpush1.msra.mxu0 0.0
  %274 = vmatprep.subr.mxu0 0.0
  %275 = vmatpush1.msra.mxu0 0.0
  %276 = vmatprep.subr.mxu0 0.0
  %277 = vmatpush1.msra.mxu0 0.0
  %278 = vmatprep.subr.mxu0 0.0
  %279 = vmatpush1.msra.mxu0 0.0
  %280 = vmatprep.subr.mxu0 0.0
  %281 = vmatpush1.msra.mxu0 0.0
  %282 = vmatprep.subr.mxu0 0.0
  %283 = vmatpush1.msra.mxu0 0.0
  %284 = vmatprep.subr.mxu0 0.0
  %285 = vmatpush1.msra.mxu0 0.0
  %286 = vmatprep.subr.mxu0 0.0
  %287 = vmatpush1.msra.mxu0 0.0
  %288 = vmatprep.subr.mxu0 0.0
  %289 = vmatpush1.msra.mxu0 0.0
  %290 = vmatprep.mubr.f32.mxu0 0.0
  %291 = vmatmul.mubr.f32.gmra.mrb[0].mxu0 %v203
  %v292 = vpop.f32.mrb[0].mxu0
  %v293 = vadd.f32 %v199, %v292
  %v294 = vpop.f32.mrb[0].mxu0
  %295 = vmatprep.mubr.f32.mxu0 0.0
  %296 = vmatmul.mubr.f32.gmra.mrb[0].mxu0 %v206
  %v297 = vpop.f32.mrb[0].mxu0
  %v298 = vadd.f32 %v199, %v297
  %v299 = vpop.f32.mrb[0].mxu0
  %300 = vmatprep.mubr.f32.mxu0 0.0
  %301 = vmatmul.mubr.f32.gmra.mrb[0].mxu0 %v209
  %v302 = vpop.f32.mrb[0].mxu0
  %v303 = vadd.f32 %v199, %v302
  %v304 = vpop.f32.mrb[0].mxu0
  %305 = vmatprep.mubr.f32.mxu0 0.0
  %306 = vmatmul.mubr.f32.gmra.mrb[0].mxu0 %v212
  %v307 = vpop.f32.mrb[0].mxu0
  %v308 = vadd.f32 %v199, %v307
  %v309 = vpop.f32.mrb[0].mxu0
  %310 = vmatprep.mubr.f32.mxu0 0.0
  %311 = vmatmul.mubr.f32.gmra.mrb[0].mxu0 %v215
  %v312 = vpop.f32.mrb[0].mxu0
  %v313 = vadd.f32 %v199, %v312
  %v314 = vpop.f32.mrb[0].mxu0
  %315 = vmatprep.mubr.f32.mxu0 0.0
  %316 = vmatmul.mubr.f32.gmra.mrb[0].mxu0 %v218
  %v317 = vpop.f32.mrb[0].mxu0
  %v318 = vadd.f32 %v199, %v317
  %v319 = vpop.f32.mrb[0].mxu0
  %320 = vmatprep.mubr.f32.mxu0 0.0
  %321 = vmatmul.mubr.f32.gmra.mrb[0].mxu0 %v221
  %v322 = vpop.f32.mrb[0].mxu0
  %v323 = vadd.f32 %v199, %v322
  %v324 = vpop.f32.mrb[0].mxu0
  %325 = vmatprep.mubr.f32.mxu0 0.0
  %326 = vmatmul.mubr.f32.gmra.mrb[0].mxu0 %v224
  %v327 = vpop.f32.mrb[0].mxu0
  %v328 = vadd.f32 %v199, %v327
  %v329 = vpop.f32.mrb[0].mxu0
  %330 = vdwg.mxu0
  %v331 = vmax.f32 %v293, 0.0
  %v332 = vmax.f32 %v298, 0.0
  %v333 = vmax.f32 %v303, 0.0
  %v334 = vmax.f32 %v308, 0.0
  %v335 = vmax.f32 %v313, 0.0
  %v336 = vmax.f32 %v318, 0.0
  %v337 = vmax.f32 %v323, 0.0
  %v338 = vmax.f32 %v328, 0.0
  %v339 = vld [vmem:[%s5] sm:$0xff]
  %v340 = vld [vmem:[%s5 + $0x8] sm:$0xff]
  %v341 = vld [vmem:[%s5 + $0x10] sm:$0xff]
  %v342 = vld [vmem:[%s5 + $0x18] sm:$0x3f]
  %v343 = vld [vmem:[%s6] sm:$0x1]
  %v345 = vlaneseq
  %v346 = vshrl.u32 %v345, 7
  %v347 = vsub.s32 0, %v346
  %v348 = vrot.slane %v343, %v347
  %vm350 = vcmask 244736
  %v352 = vsel %vm350, %v331, 0
  %v355 = vsel %vm350, %v332, 0
  %v358 = vsel %vm350, %v333, 0
  %v361 = vsel %vm350, %v334, 0
  %v364 = vsel %vm350, %v335, 0
  %v367 = vsel %vm350, %v336, 0
  %v370 = vsel %vm350, %v337, 0
  %v373 = vsel %vm350, %v338, 0
  %vm375 = vcmask 1045504
  %v377 = vsel %vm375, %v342, 0
  %379 = vmatprep.subr.mxu0 0.0
  %380 = vmatpush1.msra.mxu0 %v339
  %381 = vmatprep.subr.mxu0 0.0
  %382 = vmatpush1.msra.mxu0 %v340
  %383 = vmatprep.subr.mxu0 0.0
  %384 = vmatpush1.msra.mxu0 %v341
  %385 = vmatprep.subr.mxu0 0.0
  %386 = vmatpush1.msra.mxu0 %v377
  %387 = vmatprep.subr.mxu0 0.0
  %388 = vmatpush1.msra.mxu0 0.0
  %389 = vmatprep.subr.mxu0 0.0
  %390 = vmatpush1.msra.mxu0 0.0
  %391 = vmatprep.subr.mxu0 0.0
  %392 = vmatpush1.msra.mxu0 0.0
  %393 = vmatprep.subr.mxu0 0.0
  %394 = vmatpush1.msra.mxu0 0.0
  %395 = vmatprep.subr.mxu0 0.0
  %396 = vmatpush1.msra.mxu0 0.0
  %397 = vmatprep.subr.mxu0 0.0
  %398 = vmatpush1.msra.mxu0 0.0
  %399 = vmatprep.subr.mxu0 0.0
  %400 = vmatpush1.msra.mxu0 0.0
  %401 = vmatprep.subr.mxu0 0.0
  %402 = vmatpush1.msra.mxu0 0.0
  %403 = vmatprep.subr.mxu0 0.0
  %404 = vmatpush1.msra.mxu0 0.0
  %405 = vmatprep.subr.mxu0 0.0
  %406 = vmatpush1.msra.mxu0 0.0
  %407 = vmatprep.subr.mxu0 0.0
  %408 = vmatpush1.msra.mxu0 0.0
  %409 = vmatprep.subr.mxu0 0.0
  %410 = vmatpush1.msra.mxu0 0.0
  %411 = vmatprep.subr.mxu0 0.0
  %412 = vmatpush1.msra.mxu0 0.0
  %413 = vmatprep.subr.mxu0 0.0
  %414 = vmatpush1.msra.mxu0 0.0
  %415 = vmatprep.subr.mxu0 0.0
  %416 = vmatpush1.msra.mxu0 0.0
  %417 = vmatprep.subr.mxu0 0.0
  %418 = vmatpush1.msra.mxu0 0.0
  %419 = vmatprep.subr.mxu0 0.0
  %420 = vmatpush1.msra.mxu0 0.0
  %421 = vmatprep.subr.mxu0 0.0
  %422 = vmatpush1.msra.mxu0 0.0
  %423 = vmatprep.subr.mxu0 0.0
  %424 = vmatpush1.msra.mxu0 0.0
  %425 = vmatprep.subr.mxu0 0.0
  %426 = vmatpush1.msra.mxu0 0.0
  %427 = vmatprep.subr.mxu0 0.0
  %428 = vmatpush1.msra.mxu0 0.0
  %429 = vmatprep.subr.mxu0 0.0
  %430 = vmatpush1.msra.mxu0 0.0
  %431 = vmatprep.subr.mxu0 0.0
  %432 = vmatpush1.msra.mxu0 0.0
  %433 = vmatprep.subr.mxu0 0.0
  %434 = vmatpush1.msra.mxu0 0.0
  %435 = vmatprep.subr.mxu0 0.0
  %436 = vmatpush1.msra.mxu0 0.0
  %437 = vmatprep.subr.mxu0 0.0
  %438 = vmatpush1.msra.mxu0 0.0
  %439 = vmatprep.subr.mxu0 0.0
  %440 = vmatpush1.msra.mxu0 0.0
  %441 = vmatprep.subr.mxu0 0.0
  %442 = vmatpush1.msra.mxu0 0.0
  %443 = vmatprep.mubr.f32.mxu0 0.0
  %444 = vmatmul.mubr.f32.gmra.mrb[0].mxu0 %v352
  %v445 = vpop.f32.mrb[0].mxu0
  %v446 = vadd.f32 %v348, %v445
  %v447 = vpop.f32.mrb[0].mxu0
  %448 = vmatprep.mubr.f32.mxu0 0.0
  %449 = vmatmul.mubr.f32.gmra.mrb[0].mxu0 %v355
  %v450 = vpop.f32.mrb[0].mxu0
  %v451 = vadd.f32 %v348, %v450
  %v452 = vpop.f32.mrb[0].mxu0
  %453 = vmatprep.mubr.f32.mxu0 0.0
  %454 = vmatmul.mubr.f32.gmra.mrb[0].mxu0 %v358
  %v455 = vpop.f32.mrb[0].mxu0
  %v456 = vadd.f32 %v348, %v455
  %v457 = vpop.f32.mrb[0].mxu0
  %458 = vmatprep.mubr.f32.mxu0 0.0
  %459 = vmatmul.mubr.f32.gmra.mrb[0].mxu0 %v361
  %v460 = vpop.f32.mrb[0].mxu0
  %v461 = vadd.f32 %v348, %v460
  %v462 = vpop.f32.mrb[0].mxu0
  %463 = vmatprep.mubr.f32.mxu0 0.0
  %464 = vmatmul.mubr.f32.gmra.mrb[0].mxu0 %v364
  %v465 = vpop.f32.mrb[0].mxu0
  %v466 = vadd.f32 %v348, %v465
  %v467 = vpop.f32.mrb[0].mxu0
  %468 = vmatprep.mubr.f32.mxu0 0.0
  %469 = vmatmul.mubr.f32.gmra.mrb[0].mxu0 %v367
  %v470 = vpop.f32.mrb[0].mxu0
  %v471 = vadd.f32 %v348, %v470
  %v472 = vpop.f32.mrb[0].mxu0
  %473 = vmatprep.mubr.f32.mxu0 0.0
  %474 = vmatmul.mubr.f32.gmra.mrb[0].mxu0 %v370
  %v475 = vpop.f32.mrb[0].mxu0
  %v476 = vadd.f32 %v348, %v475
  %v477 = vpop.f32.mrb[0].mxu0
  %478 = vmatprep.mubr.f32.mxu0 0.0
  %479 = vmatmul.mubr.f32.gmra.mrb[0].mxu0 %v373
  %v480 = vpop.f32.mrb[0].mxu0
  %v481 = vadd.f32 %v348, %v480
  %v482 = vpop.f32.mrb[0].mxu0
  %483 = vdwg.mxu0
  %v484 = vmax.f32 %v446, 0.0
  %v485 = vmax.f32 %v451, 0.0
  %v486 = vmax.f32 %v456, 0.0
  %v487 = vmax.f32 %v461, 0.0
  %v488 = vmax.f32 %v466, 0.0
  %v489 = vmax.f32 %v471, 0.0
  %v490 = vmax.f32 %v476, 0.0
  %v491 = vmax.f32 %v481, 0.0
  %v492 = vld [vmem:[%s7] sm:$0xff]
  %v493 = vld [vmem:[%s7 + $0x8] sm:$0xff]
  %v494 = vld [vmem:[%s7 + $0x10] sm:$0xf]
  %v495 = vld [vmem:[%s8] sm:$0x1]
  %v497 = vlaneseq
  %v498 = vshrl.u32 %v497, 7
  %v499 = vsub.s32 0, %v498
  %v500 = vrot.slane %v495, %v499
  %vm502 = vcmask 162816
  %v504 = vsel %vm502, %v484, 0
  %v507 = vsel %vm502, %v485, 0
  %v510 = vsel %vm502, %v486, 0
  %v513 = vsel %vm502, %v487, 0
  %v516 = vsel %vm502, %v488, 0
  %v519 = vsel %vm502, %v489, 0
  %v522 = vsel %vm502, %v490, 0
  %v525 = vsel %vm502, %v491, 0
  %vm527 = vcmask 1043456
  %v529 = vsel %vm527, %v494, 0
  %531 = vmatprep.subr.mxu0 0.0
  %532 = vmatpush1.msra.mxu0 %v492
  %533 = vmatprep.subr.mxu0 0.0
  %534 = vmatpush1.msra.mxu0 %v493
  %535 = vmatprep.subr.mxu0 0.0
  %536 = vmatpush1.msra.mxu0 %v529
  %537 = vmatprep.subr.mxu0 0.0
  %538 = vmatpush1.msra.mxu0 0.0
  %539 = vmatprep.subr.mxu0 0.0
  %540 = vmatpush1.msra.mxu0 0.0
  %541 = vmatprep.subr.mxu0 0.0
  %542 = vmatpush1.msra.mxu0 0.0
  %543 = vmatprep.subr.mxu0 0.0
  %544 = vmatpush1.msra.mxu0 0.0
  %545 = vmatprep.subr.mxu0 0.0
  %546 = vmatpush1.msra.mxu0 0.0
  %547 = vmatprep.subr.mxu0 0.0
  %548 = vmatpush1.msra.mxu0 0.0
  %549 = vmatprep.subr.mxu0 0.0
  %550 = vmatpush1.msra.mxu0 0.0
  %551 = vmatprep.subr.mxu0 0.0
  %552 = vmatpush1.msra.mxu0 0.0
  %553 = vmatprep.subr.mxu0 0.0
  %554 = vmatpush1.msra.mxu0 0.0
  %555 = vmatprep.subr.mxu0 0.0
  %556 = vmatpush1.msra.mxu0 0.0
  %557 = vmatprep.subr.mxu0 0.0
  %558 = vmatpush1.msra.mxu0 0.0
  %559 = vmatprep.subr.mxu0 0.0
  %560 = vmatpush1.msra.mxu0 0.0
  %561 = vmatprep.subr.mxu0 0.0
  %562 = vmatpush1.msra.mxu0 0.0
  %563 = vmatprep.subr.mxu0 0.0
  %564 = vmatpush1.msra.mxu0 0.0
  %565 = vmatprep.subr.mxu0 0.0
  %566 = vmatpush1.msra.mxu0 0.0
  %567 = vmatprep.subr.mxu0 0.0
  %568 = vmatpush1.msra.mxu0 0.0
  %569 = vmatprep.subr.mxu0 0.0
  %570 = vmatpush1.msra.mxu0 0.0
  %571 = vmatprep.subr.mxu0 0.0
  %572 = vmatpush1.msra.mxu0 0.0
  %573 = vmatprep.subr.mxu0 0.0
  %574 = vmatpush1.msra.mxu0 0.0
  %575 = vmatprep.subr.mxu0 0.0
  %576 = vmatpush1.msra.mxu0 0.0
  %577 = vmatprep.subr.mxu0 0.0
  %578 = vmatpush1.msra.mxu0 0.0
  %579 = vmatprep.subr.mxu0 0.0
  %580 = vmatpush1.msra.mxu0 0.0
  %581 = vmatprep.subr.mxu0 0.0
  %582 = vmatpush1.msra.mxu0 0.0
  %583 = vmatprep.subr.mxu0 0.0
  %584 = vmatpush1.msra.mxu0 0.0
  %585 = vmatprep.subr.mxu0 0.0
  %586 = vmatpush1.msra.mxu0 0.0
  %587 = vmatprep.subr.mxu0 0.0
  %588 = vmatpush1.msra.mxu0 0.0
  %589 = vmatprep.subr.mxu0 0.0
  %590 = vmatpush1.msra.mxu0 0.0
  %591 = vmatprep.subr.mxu0 0.0
  %592 = vmatpush1.msra.mxu0 0.0
  %593 = vmatprep.subr.mxu0 0.0
  %594 = vmatpush1.msra.mxu0 0.0
  %595 = vmatprep.mubr.f32.mxu0 0.0
  %596 = vmatmul.mubr.f32.gmra.mrb[0].mxu0 %v504
  %v597 = vpop.f32.mrb[0].mxu0
  %v598 = vadd.f32 %v500, %v597
  %v599 = vpop.f32.mrb[0].mxu0
  %600 = vmatprep.mubr.f32.mxu0 0.0
  %601 = vmatmul.mubr.f32.gmra.mrb[0].mxu0 %v507
  %v602 = vpop.f32.mrb[0].mxu0
  %v603 = vadd.f32 %v500, %v602
  %v604 = vpop.f32.mrb[0].mxu0
  %605 = vmatprep.mubr.f32.mxu0 0.0
  %606 = vmatmul.mubr.f32.gmra.mrb[0].mxu0 %v510
  %v607 = vpop.f32.mrb[0].mxu0
  %v608 = vadd.f32 %v500, %v607
  %v609 = vpop.f32.mrb[0].mxu0
  %610 = vmatprep.mubr.f32.mxu0 0.0
  %611 = vmatmul.mubr.f32.gmra.mrb[0].mxu0 %v513
  %v612 = vpop.f32.mrb[0].mxu0
  %v613 = vadd.f32 %v500, %v612
  %v614 = vpop.f32.mrb[0].mxu0
  %615 = vmatprep.mubr.f32.mxu0 0.0
  %616 = vmatmul.mubr.f32.gmra.mrb[0].mxu0 %v516
  %v617 = vpop.f32.mrb[0].mxu0
  %v618 = vadd.f32 %v500, %v617
  %v619 = vpop.f32.mrb[0].mxu0
  %620 = vmatprep.mubr.f32.mxu0 0.0
  %621 = vmatmul.mubr.f32.gmra.mrb[0].mxu0 %v519
  %v622 = vpop.f32.mrb[0].mxu0
  %v623 = vadd.f32 %v500, %v622
  %v624 = vpop.f32.mrb[0].mxu0
  %625 = vmatprep.mubr.f32.mxu0 0.0
  %626 = vmatmul.mubr.f32.gmra.mrb[0].mxu0 %v522
  %v627 = vpop.f32.mrb[0].mxu0
  %v628 = vadd.f32 %v500, %v627
  %v629 = vpop.f32.mrb[0].mxu0
  %630 = vmatprep.mubr.f32.mxu0 0.0
  %631 = vmatmul.mubr.f32.gmra.mrb[0].mxu0 %v525
  %v632 = vpop.f32.mrb[0].mxu0
  %v633 = vadd.f32 %v500, %v632
  %v634 = vpop.f32.mrb[0].mxu0
  %635 = vdwg.mxu0
  %vm636 = vcmask 130048
  %637 = vst.msk [vmem:[%s9] sm:$0xff] %vm636, %v598
  %638 = vst.msk [vmem:[%s9 + $0x8] sm:$0xff] %vm636, %v603
  %639 = vst.msk [vmem:[%s9 + $0x10] sm:$0xff] %vm636, %v608
  %640 = vst.msk [vmem:[%s9 + $0x18] sm:$0xff] %vm636, %v613
  %641 = vst.msk [vmem:[%s9 + $0x20] sm:$0xff] %vm636, %v618
  %642 = vst.msk [vmem:[%s9 + $0x28] sm:$0xff] %vm636, %v623
  %643 = vst.msk [vmem:[%s9 + $0x30] sm:$0xff] %vm636, %v628
  %644 = vst.msk [vmem:[%s9 + $0x38] sm:$0xff] %vm636, %v633
  // Predicated region
  $region38: #{tpu_custom_call.1} parent=0 // pred_check
    _
  $region39: #{tpu_custom_call.1} parent=0 // pred_check_branch
    %646 = sbr.rel (0) target = $region41
  $region40: #{tpu_custom_call.1} parent=0 // pred_region
    _
  $region41: #{tpu_custom_call.1} parent=0 // pred_fallthru
    _
  // Predicated region
  $region42: #{tpu_custom_call.1} parent=0 // pred_check
    _
  $region43: #{tpu_custom_call.1} parent=0 // pred_check_branch
    %648 = sbr.rel (0) target = $region45
  $region44: #{tpu_custom_call.1} parent=0 // pred_region
    _
  $region45: #{tpu_custom_call.1} parent=0 // pred_fallthru
    _

</llo_original>
